<compile_context>
chip_gen: v7x
topology: tpu7x:2x2x1
jax: 0.10.0
libtpu: 0.0.40
codegen_flags: <defaults>
</compile_context>

<pallas_src>
import functools

import jax
import jax.numpy as jnp
import numpy as np
from jax.experimental import pallas as pl
from jax.experimental.pallas import tpu as pltpu


def attention_kernel(x_ref, w_ref, b_ref, ctx_ref, attn_ref, *, compute_dtype):
    # x_ref:    (TB, S, D) lstm output tile (native dtype in VMEM)
    # w_ref:    (1, D)     attention projection weight, lane-dense
    # b_ref:    (1, 1)     attention projection bias (SMEM scalar)
    # ctx_ref:  (TB, D)    context output tile
    # attn_ref: (TB, S)    attention-weight output tile (lane-dense along S)
    x = x_ref[...].astype(compute_dtype)
    w = w_ref[0, :].astype(compute_dtype)                          # (D,)
    b = b_ref[0, 0]                                                # f32 scalar

    # Linear(2H -> 1): scores[t, s] = sum_d x[t, s, d] * w[d] + b.
    # VPU multiply + XLU lane reduce; f32 accumulation fused into the reduce
    # (no (TB, S, D) f32 temporary is materialized).
    scores = jnp.sum(x * w, axis=-1, dtype=jnp.float32) + b        # (TB, S)

    # Numerically-stable softmax over the sequence (lane) axis, in f32.
    # Padded rows of a ragged last batch block only see per-row math and their
    # writes are dropped by Pallas, so garbage there is harmless.
    m = jnp.max(scores, axis=-1, keepdims=True)                    # (TB, 1)
    e = jnp.exp(scores - m)                                        # (TB, S)
    denom = jnp.sum(e, axis=-1, keepdims=True)                     # (TB, 1)
    attn = e * pl.reciprocal(denom)                                # (TB, S) f32

    # context[t, d] = sum_s attn[t, s] * x[t, s, d]  (sublane reduce over S,
    # f32 accumulation fused into the reduce).
    weighted = attn.astype(compute_dtype)[:, :, None] * x          # (TB, S, D)
    ctx = jnp.sum(weighted, axis=1, dtype=jnp.float32)             # (TB, D)

    attn_ref[...] = attn.astype(attn_ref.dtype)
    ctx_ref[...] = ctx.astype(ctx_ref.dtype)


def _tpu_config():
    """Per-generation scoped-VMEM limit (bytes) + device-kind string."""
    phys = 64 * 1024 * 1024                 # conservative default (v7x per-TC)
    kind = ""
    try:
        kind = jax.devices()[0].device_kind.lower()
        if "v7" not in kind:
            phys = 128 * 1024 * 1024        # v5e / v6e physical VMEM
    except Exception:
        pass
    try:                                    # prefer the exact hardware query
        cap = int(getattr(pltpu.get_tpu_info(), "vmem_capacity_bytes", 0))
        if cap > 0:
            phys = cap
    except Exception:
        pass
    vmem_limit = (phys * 3) // 4            # ~96 MiB v5e/v6e, ~48 MiB v7x
    return int(vmem_limit), kind


def _sublane_multiple(dtype):
    itemsize = jnp.dtype(dtype).itemsize
    if itemsize >= 4:
        return 8
    if itemsize == 2:
        return 16
    return 32


def _choose_batch_block(B, S, D, x_dtype, compute_dtype, vmem_limit):
    """Pick the batch block TB from a real footprint model.

    Per batch row the kernel needs roughly:
      2 double-buffered x tiles (native dtype) + ~3 tile-sized temporaries
      (compute dtype: x*w product, weighted product, slack) + small outputs.
    TB is rounded to the packed-dtype sublane multiple and capped so the batch
    grid keeps >= 2 blocks (feeds both TensorCores on v7x).
    """
    mult = _sublane_multiple(x_dtype)
    if B <= mult:
        return B                            # full batch dim: (8,128)-rule exempt
    native = jnp.dtype(x_dtype).itemsize
    comp = jnp.dtype(compute_dtype).itemsize
    per_row = S * D * (2 * native + 3 * comp)
    usable = (vmem_limit * 85) // 100       # headroom for outputs / scratch
    tb = max(1, usable // max(per_row, 1))
    tb = min(tb, B)
    if B >= 2 * mult:                       # keep >= 2 blocks on the parallel axis
        half = -(-B // 2)                   # cdiv(B, 2)
        half = -(-half // mult) * mult      # round up to sublane multiple
        tb = min(tb, half)
    tb = max(mult, (tb // mult) * mult)
    return tb


def attention_forward(lstm_output, w, b):
    """lstm_output: (B, S, D); w: (1, D) projection weight; b: (1, 1) f32 bias.

    Returns (context (B, D), attn_weights (B, S, 1)) — same as the PyTorch
    module's forward.
    """
    B, S, D = lstm_output.shape
    vmem_limit, kind = _tpu_config()

    # v5e's VPU/EUP have no sub-32-bit datapath: upcast once inside the kernel
    # there; keep the native dtype on v6e/v7x to halve intermediate footprint.
    compute_dtype = lstm_output.dtype
    if "v5" in kind and jnp.dtype(compute_dtype).itemsize < 4:
        compute_dtype = jnp.float32

    TB = _choose_batch_block(B, S, D, lstm_output.dtype, compute_dtype, vmem_limit)
    grid = (pl.cdiv(B, TB),)

    kernel = functools.partial(attention_kernel, compute_dtype=compute_dtype)
    ctx, attn2d = pl.pallas_call(
        kernel,
        out_shape=(
            jax.ShapeDtypeStruct((B, D), lstm_output.dtype),
            jax.ShapeDtypeStruct((B, S), lstm_output.dtype),
        ),
        grid=grid,
        in_specs=[
            pl.BlockSpec((TB, S, D), lambda i: (i, 0, 0)),
            pl.BlockSpec((1, D), lambda i: (0, 0)),
            pl.BlockSpec(memory_space=pltpu.MemorySpace.SMEM),   # bias scalar
        ],
        out_specs=(
            pl.BlockSpec((TB, D), lambda i: (i, 0)),
            pl.BlockSpec((TB, S), lambda i: (i, 0)),
        ),
        compiler_params=pltpu.CompilerParams(
            dimension_semantics=("parallel",),
            vmem_limit_bytes=vmem_limit,
        ),
    )(lstm_output, w, b)

    # Possible v7x follow-up (verify with a bundle dump first): if the VPU/XLU
    # slots bind before DMA at 3.2 TB/s, offload the D-reduce to the idle MXU
    # via an N=1 jnp.dot on x.reshape(TB*S, D).

    # Match the PyTorch (B, S, 1) attention-weight shape outside the kernel
    # (lane-dense inside; this reshape is free layout plumbing here).
    return ctx, attn2d[:, :, None]


def reference_forward(lstm_output, w, b):
    scores = jnp.einsum("bsd,od->bso", lstm_output, w) + b[0, 0]   # (B, S, 1)
    attn = jax.nn.softmax(scores, axis=1)
    ctx = jnp.sum(attn * lstm_output, axis=1)
    return ctx, attn


def _run_case(key, B, S, hidden_size, dtype=jnp.float32):
    D = 2 * hidden_size
    k_x, k_w, k_b = jax.random.split(key, 3)
    lstm_output = jax.random.normal(k_x, (B, S, D), dtype=dtype)

    # PyTorch default Linear init: U(-1/sqrt(fan_in), 1/sqrt(fan_in)).
    bound = 1.0 / np.sqrt(D)
    w = jax.random.uniform(k_w, (1, D), minval=-bound, maxval=bound, dtype=dtype)
    b = jax.random.uniform(k_b, (1, 1), minval=-bound, maxval=bound,
                           dtype=jnp.float32)

    ctx, attn = attention_forward(lstm_output, w, b)
    ctx = jax.block_until_ready(ctx)
    attn = jax.block_until_ready(attn)

    ctx_ref, attn_ref = reference_forward(lstm_output, w, b)
    np.testing.assert_allclose(np.asarray(ctx), np.asarray(ctx_ref),
                               rtol=1e-5, atol=1e-5)
    np.testing.assert_allclose(np.asarray(attn), np.asarray(attn_ref),
                               rtol=1e-5, atol=1e-5)


if __name__ == "__main__":
    key = jax.random.PRNGKey(0)
    k0, k1 = jax.random.split(key)

    # Small case matching the module spec (hidden=16 -> D=32).
    _run_case(k0, B=2, S=8, hidden_size=16)

    # Larger case exercising the batched-grid path (2 blocks, ragged last one).
    _run_case(k1, B=20, S=24, hidden_size=64)

    print("KERNEL_OK")
</pallas_src>

<mosaic_0001>
module attributes {stable_mosaic.version = 11 : i64} {
  func.func @attention_kernel(%arg0: i32, %arg1: memref<2x8x32xf32, #tpu.memory_space<vmem>>, %arg2: memref<1x32xf32, #tpu.memory_space<vmem>>, %arg3: memref<1x1xf32, #tpu.memory_space<smem>>, %arg4: memref<2x32xf32, #tpu.memory_space<vmem>>, %arg5: memref<2x8xf32, #tpu.memory_space<vmem>>) attributes {dimension_semantics = [#tpu.dimension_semantics<parallel>], iteration_bounds = array<i64: 1>, scalar_prefetch = 0 : i64, scratch_operands = 0 : i64, tpu.core_type = #tpu.core_type<tc>, window_params = [{transform_indices = @transform_0, window_bounds = array<i64: 2, 8, 32>}, {pipeline_mode = #tpu.pipeline_mode<synchronous>, transform_indices = @transform_1, window_bounds = array<i64: 1, 32>}, {transform_indices = @transform_2, window_bounds = array<i64: 1, 1>}, {transform_indices = @transform_3, window_bounds = array<i64: 2, 32>}, {transform_indices = @transform_4, window_bounds = array<i64: 2, 8>}]} {
    %c0 = arith.constant 0 : index
    %c0_0 = arith.constant 0 : index
    %c0_1 = arith.constant 0 : index
    %0 = vector.load %arg1[%c0, %c0_0, %c0_1] : memref<2x8x32xf32, #tpu.memory_space<vmem>>, vector<2x8x32xf32>
    %c0_2 = arith.constant 0 : index
    %c0_3 = arith.constant 0 : index
    %1 = vector.load %arg2[%c0_2, %c0_3] : memref<1x32xf32, #tpu.memory_space<vmem>>, vector<1x32xf32>
    %2 = vector.shape_cast %1 : vector<1x32xf32> to vector<32xf32>
    %c0_4 = arith.constant 0 : index
    %c0_5 = arith.constant 0 : index
    %3 = memref.load %arg3[%c0_4, %c0_5] : memref<1x1xf32, #tpu.memory_space<smem>>
    %4 = vector.shape_cast %2 : vector<32xf32> to vector<1x1x32xf32>
    %5 = vector.broadcast %4 : vector<1x1x32xf32> to vector<2x8x32xf32>
    %6 = arith.mulf %0, %5 : vector<2x8x32xf32>
    %cst = arith.constant dense<0.000000e+00> : vector<2x8xf32>
    %7 = vector.multi_reduction <add>, %6, %cst [2] : vector<2x8x32xf32> to vector<2x8xf32>
    %8 = vector.broadcast %3 : f32 to vector<2x8xf32>
    %9 = arith.addf %7, %8 : vector<2x8xf32>
    %cst_6 = arith.constant dense<0xFF800000> : vector<2xf32>
    %10 = vector.multi_reduction <maximumf>, %9, %cst_6 [1] : vector<2x8xf32> to vector<2xf32>
    %11 = vector.shape_cast %10 : vector<2xf32> to vector<2x1xf32>
    %12 = vector.broadcast %11 : vector<2x1xf32> to vector<2x8xf32>
    %13 = arith.subf %9, %12 : vector<2x8xf32>
    %14 = math.exp %13 : vector<2x8xf32>
    %cst_7 = arith.constant dense<0.000000e+00> : vector<2xf32>
    %15 = vector.multi_reduction <add>, %14, %cst_7 [1] : vector<2x8xf32> to vector<2xf32>
    %16 = vector.shape_cast %15 : vector<2xf32> to vector<2x1xf32>
    %17 = tpu.reciprocal %16 : vector<2x1xf32> -> vector<2x1xf32>
    %18 = vector.broadcast %17 : vector<2x1xf32> to vector<2x8xf32>
    %19 = arith.mulf %14, %18 : vector<2x8xf32>
    %20 = vector.shape_cast %19 : vector<2x8xf32> to vector<2x8x1xf32>
    %21 = vector.broadcast %20 : vector<2x8x1xf32> to vector<2x8x32xf32>
    %22 = arith.mulf %21, %0 : vector<2x8x32xf32>
    %cst_8 = arith.constant dense<0.000000e+00> : vector<2x32xf32>
    %23 = vector.multi_reduction <add>, %22, %cst_8 [1] : vector<2x8x32xf32> to vector<2x32xf32>
    %c0_9 = arith.constant 0 : index
    %c0_10 = arith.constant 0 : index
    %24 = vector.load %arg5[%c0_9, %c0_10] : memref<2x8xf32, #tpu.memory_space<vmem>>, vector<2x8xf32>
    tpu.vector_store %arg5[%c0_9, %c0_10], %19 {strides = array<i32>} : memref<2x8xf32, #tpu.memory_space<vmem>>, vector<2x8xf32>,
    %c0_11 = arith.constant 0 : index
    %c0_12 = arith.constant 0 : index
    %25 = vector.load %arg4[%c0_11, %c0_12] : memref<2x32xf32, #tpu.memory_space<vmem>>, vector<2x32xf32>
    tpu.vector_store %arg4[%c0_11, %c0_12], %23 {strides = array<i32>} : memref<2x32xf32, #tpu.memory_space<vmem>>, vector<2x32xf32>,
    return
  }
  func.func @transform_0(%arg0: i32) -> (i32, i32, i32) {
    %c0_i32 = arith.constant 0 : i32
    %c0_i32_0 = arith.constant 0 : i32
    %c0_i32_1 = arith.constant 0 : i32
    return %arg0, %c0_i32, %c0_i32_0 : i32, i32, i32
  }
  func.func @transform_1(%arg0: i32) -> (i32, i32) {
    %c0_i32 = arith.constant 0 : i32
    %c0_i32_0 = arith.constant 0 : i32
    %c0_i32_1 = arith.constant 0 : i32
    return %c0_i32, %c0_i32_0 : i32, i32
  }
  func.func @transform_2(%arg0: i32) -> (i32, i32) {
    %c0_i32 = arith.constant 0 : i32
    %c0_i32_0 = arith.constant 0 : i32
    %c0_i32_1 = arith.constant 0 : i32
    return %c0_i32, %c0_i32_0 : i32, i32
  }
  func.func @transform_3(%arg0: i32) -> (i32, i32) {
    %c0_i32 = arith.constant 0 : i32
    %c0_i32_0 = arith.constant 0 : i32
    return %arg0, %c0_i32 : i32, i32
  }
  func.func @transform_4(%arg0: i32) -> (i32, i32) {
    %c0_i32 = arith.constant 0 : i32
    %c0_i32_0 = arith.constant 0 : i32
    return %arg0, %c0_i32 : i32, i32
  }
}

</mosaic_0001>

<llo_original>
// kernel: tpu_custom_call.1
$region0: #{tpu_custom_call.1}
  #allocation0 [shape = 'u32[]', space=smem, size = 0x4, offset = 0x4, fixed_abs, tag = 'smem constant byte address 0x4 - core index']
  #allocation1 [shape = 'u32[144,128]{1,0:T(1,128)}', space=vmem, size = 0x12000, scoped, tag = 'internal scratch']
  #allocation2 [shape = 'f32[1,1]{1,0:T(1,128)S(6)}', space=smem, size = 0x200, scoped, tag = 'scoped memory for tpu_custom_call.1']
  %s0 = inlined_call_operand.hbm [shape: f32[2,8,32], index: 0, kind: input, shape index: {}]
  %s1 = inlined_call_operand.hbm [shape: f32[1,32], index: 1, kind: input, shape index: {}]
  %s2 = inlined_call_operand.<no memory space> [shape: f32[1,1], index: 2, kind: input, shape index: {}]
  %s3 = inlined_call_operand.hbm [shape: f32[2,32], index: 3, kind: output, shape index: {0}]
  %s4 = inlined_call_operand.hbm [shape: f32[2,8], index: 4, kind: output, shape index: {1}]
  %5 = xla_tuple %s3, %s4
  %s6 = sld [smem:[#allocation0]]
  $region38: #{tpu_custom_call.1} parent=0
    _
  %s8 = ssub.s32 1, %s6
  %s9 = scalar_select 0, %s8, %s6
  %10 = sst [smem:[#allocation2]] %s2
  $region1: #{tpu_custom_call.1} parent=0
    #allocation3 [shape = 'u8[8192]{0}', space=vmem, size = 0x2000, scoped, tag = 'input window, operand 0, single buffered']
    #allocation4 [shape = 's32[1]{0}', space=sflag, size = 0x4, scoped, tag = 'scoped memory for tpu_custom_call.1']
    #allocation5 [shape = 's32[1]{0}', space=sflag, size = 0x4, scoped, tag = 'scoped memory for tpu_custom_call.1']
    #allocation6 [shape = 'u8[512]{0}', space=vmem, size = 0x400, scoped, tag = 'input window, operand 1, single buffered']
    #allocation7 [shape = 's32[1]{0}', space=sflag, size = 0x4, scoped, tag = 'scoped memory for tpu_custom_call.1']
    #allocation8 [shape = 'u8[1024]{0}', space=vmem, size = 0x400, scoped, tag = 'output window, operand 0, single buffered']
    #allocation9 [shape = 'u8[1024]{0}', space=vmem, size = 0x400, scoped, tag = 'output window, operand 1, single buffered']
    #allocation10 [shape = 's32[1]{0}', space=sflag, size = 0x4, scoped, tag = 'scoped memory for tpu_custom_call.1']
    %11 = vsyncpa [#allocation4], 0
    %12 = vsyncpa [#allocation7], 0
    %13 = vsyncpa [#allocation5], 0
    %14 = vsyncpa [#allocation10], 0
    // Predicated region
    $region2: #{tpu_custom_call.1} parent=1 // pred_check
      _
    $region3: #{tpu_custom_call.1} parent=1 // pred_check_branch
      %16 = sbr.rel (0) target = $region5
    $region4: #{tpu_custom_call.1} parent=1 // pred_region
      %s18 = ssub.s32 256, 256
      %19 = vsyncadd [#allocation4], %s18
      %s20 = sshll.u32 [#allocation3], 4
      %s21 = int_to_ptr.vmem [resolvable:$true] %s20
      %26 = dma.hbm_to_vmem [thread:$0]  %s0, 256, %s21, [#allocation4], 128, 128, 8
    $region5: #{tpu_custom_call.1} parent=1 // pred_fallthru
      _
    // Predicated region
    $region6: #{tpu_custom_call.1} parent=1 // pred_check
      _
    $region7: #{tpu_custom_call.1} parent=1 // pred_check_branch
      %28 = sbr.rel (0) target = $region9
    $region8: #{tpu_custom_call.1} parent=1 // pred_region
      %s30 = ssub.s32 16, 16
      %31 = vsyncadd [#allocation7], %s30
      %s33 = sshll.u32 [#allocation6], 4
      %s34 = int_to_ptr.vmem [resolvable:$true] %s33
      %36 = dma.hbm_to_vmem [thread:$0]  %s1, 16, %s34, [#allocation7]
    $region9: #{tpu_custom_call.1} parent=1 // pred_fallthru
      _
    // Predicated region
    $region10: #{tpu_custom_call.1} parent=1 // pred_check
      _
    $region11: #{tpu_custom_call.1} parent=1 // pred_check_branch
      %38 = sbr.rel (0) target = $region13
    $region12: #{tpu_custom_call.1} parent=1 // pred_region
      _
    $region13: #{tpu_custom_call.1} parent=1 // pred_fallthru
      _
    // Predicated region
    $region14: #{tpu_custom_call.1} parent=1 // pred_check
      _
    $region15: #{tpu_custom_call.1} parent=1 // pred_check_branch
      %40 = sbr.rel (0) target = $region17
    $region16: #{tpu_custom_call.1} parent=1 // pred_region
      %41 = dma.done [#allocation4], 256
    $region17: #{tpu_custom_call.1} parent=1 // pred_fallthru
      _
    // Predicated region
    $region18: #{tpu_custom_call.1} parent=1 // pred_check
      _
    $region19: #{tpu_custom_call.1} parent=1 // pred_check_branch
      %43 = sbr.rel (0) target = $region21
    $region20: #{tpu_custom_call.1} parent=1 // pred_region
      %44 = dma.done [#allocation7], 16
    $region21: #{tpu_custom_call.1} parent=1 // pred_fallthru
      _
    %v45 = vld [vmem:[#allocation3] sm:$0xff]
    %v46 = vld [vmem:[#allocation3 + $0x8] sm:$0xff]
    %v47 = vld [vmem:[#allocation6] sm:$0x1]
    %s48 = sld [smem:[#allocation2]]
    %v50 = vlaneseq
    %v51 = vshrl.u32 %v50, 7
    %v52 = vsub.s32 0, %v51
    %v53 = vrot.slane %v47, %v52
    %v55 = vmul.f32 %v45, %v53
    %v56 = vmul.f32 %v46, %v53
    %vm57 = vcmask 261120
    %v58 = vsel %vm57, %v55, 0.0
    %59 = vadd.xlane.f32.xlu0 %v58
    %v60 = vpop.xlane.xlu0 %59
    %v61 = vsel %vm57, %v56, 0.0
    %62 = vadd.xlane.f32.xlu0 %v61
    %v63 = vpop.xlane.xlu0 %62
    %v64 = vstv %s48
    %v65 = vadd.f32 %v60, %v64
    %v66 = vadd.f32 %v63, %v64
    %v69 = vlaneseq
    %v70 = vand.u32 %v69, 127
    %v71 = vlaneseq
    %v72 = vshrl.u32 %v71, 7
    %v73 = vsub.s32 %v70, %v72
    %v74 = vrot.slane %v65, %v73
    %v75 = vlaneseq
    %v76 = vshrl.u32 %v75, 7
    %v77 = vsub.s32 %v70, %v76
    %v78 = vrot.slane %v66, %v77
    %vm79 = vcmask 1041409
    %v80 = vsel %vm79, %v78, %v74
    %vm82 = vcmask 58368
    %v83 = vsel %vm82, %v80, -inf
    %84 = vmax.xlane.f32.xlu0 %v83
    %v85 = vpop.xlane.xlu0 %84
    %v87 = vlaneseq
    %v88 = vshrl.u32 %v87, 7
    %v89 = vsub.s32 0, %v88
    %v90 = vrot.slane %v85, %v89
    %v91 = vlaneseq
    %v92 = vshrl.u32 %v91, 7
    %v93 = vsub.s32 1, %v92
    %v94 = vrot.slane %v85, %v93
    %v97 = vsub.f32 %v65, %v90
    %v98 = vsub.f32 %v66, %v94
    %v99 = vmul.f32 %v97, 1.442695
    %v100 = vpow.pop %v99
    %v101 = vmul.f32 %v98, 1.442695
    %v102 = vpow.pop %v101
    %105 = vset.pattern.permute.xlu0 0
    %106 = vperm.xlu0 %105, %v100
    %v107 = vpop.permute.xlu0 %106
    %108 = vset.pattern.permute.xlu0 0
    %109 = vperm.xlu0 %108, %v102
    %v110 = vpop.permute.xlu0 %109
    %v111 = vlaneseq
    %v112 = vshrl.u32 %v111, 7
    %v113 = vsub.s32 %v70, %v112
    %v114 = vrot.slane %v107, %v113
    %v115 = vlaneseq
    %v116 = vshrl.u32 %v115, 7
    %v117 = vsub.s32 %v70, %v116
    %v118 = vrot.slane %v110, %v117
    %v119 = vsel %vm79, %v118, %v114
    %v121 = vsel %vm82, %v119, 0.0
    %122 = vadd.xlane.f32.xlu0 %v121
    %v123 = vpop.xlane.xlu0 %122
    %v124 = vrcp.pop %v123
    %v126 = vlaneseq
    %v127 = vshrl.u32 %v126, 7
    %v128 = vsub.s32 0, %v127
    %v129 = vrot.slane %v124, %v128
    %v130 = vlaneseq
    %v131 = vshrl.u32 %v130, 7
    %v132 = vsub.s32 1, %v131
    %v133 = vrot.slane %v124, %v132
    %v136 = vmul.f32 %v100, %v129
    %v137 = vmul.f32 %v102, %v133
    %139 = vset.pattern.permute.xlu0 0
    %140 = vperm.xlu0 %139, %v136
    %v141 = vpop.permute.xlu0 %140
    %144 = vset.pattern.permute.xlu0 0
    %145 = vperm.xlu0 %144, %v137
    %v146 = vpop.permute.xlu0 %145
    %v148 = vmul.f32 %v141, %v45
    %v149 = vmul.f32 %v146, %v46
    %v150 = vsel %vm57, %v148, 0.0
    %v151 = vrot.slane %v150, 4
    %v152 = vadd.f32 %v150, %v151
    %v153 = vrot.slane %v152, 2
    %v154 = vadd.f32 %v152, %v153
    %v155 = vrot.slane %v154, 1
    %v156 = vadd.f32 %v154, %v155
    %v157 = vsel %vm57, %v149, 0.0
    %v158 = vrot.slane %v157, 4
    %v159 = vadd.f32 %v157, %v158
    %v160 = vrot.slane %v159, 2
    %v161 = vadd.f32 %v159, %v160
    %v162 = vrot.slane %v161, 1
    %v163 = vadd.f32 %v161, %v162
    %v164 = vlaneseq
    %v165 = vshrl.u32 %v164, 7
    %v166 = vsub.s32 %v70, %v165
    %v167 = vrot.slane %v141, %v166
    %v168 = vlaneseq
    %v169 = vshrl.u32 %v168, 7
    %v170 = vsub.s32 %v70, %v169
    %v171 = vrot.slane %v146, %v170
    %v172 = vsel %vm79, %v171, %v167
    %174 = vst.msk [vmem:[#allocation9] sm:$0x3] %vm82, %v172
    %v177 = vsel %vm79, %v163, %v156
    %vm179 = vcmask 254976
    %180 = vst.msk [vmem:[#allocation8] sm:$0x3] %vm179, %v177
    // Predicated region
    $region22: #{tpu_custom_call.1} parent=1 // pred_check
      _
    $region23: #{tpu_custom_call.1} parent=1 // pred_check_branch
      %182 = sbr.rel (0) target = $region25
    $region24: #{tpu_custom_call.1} parent=1 // pred_region
      %s184 = ssub.s32 32, 32
      %185 = vsyncadd [#allocation5], %s184
      %s187 = sshll.u32 [#allocation8], 4
      %s188 = int_to_ptr.vmem [resolvable:$true] %s187
      %190 = dma.vmem_to_hbm [thread:$0]  %s188, 32, %s3, [#allocation5]
    $region25: #{tpu_custom_call.1} parent=1 // pred_fallthru
      _
    // Predicated region
    $region26: #{tpu_custom_call.1} parent=1 // pred_check
      _
    $region27: #{tpu_custom_call.1} parent=1 // pred_check_branch
      %192 = sbr.rel (0) target = $region29
    $region28: #{tpu_custom_call.1} parent=1 // pred_region
      %s194 = ssub.s32 32, 32
      %195 = vsyncadd [#allocation10], %s194
      %s197 = sshll.u32 [#allocation9], 4
      %s198 = int_to_ptr.vmem [resolvable:$true] %s197
      %200 = dma.vmem_to_hbm [thread:$0]  %s198, 32, %s4, [#allocation10]
    $region29: #{tpu_custom_call.1} parent=1 // pred_fallthru
      _
    // Predicated region
    $region30: #{tpu_custom_call.1} parent=1 // pred_check
      _
    $region31: #{tpu_custom_call.1} parent=1 // pred_check_branch
      %202 = sbr.rel (0) target = $region33
    $region32: #{tpu_custom_call.1} parent=1 // pred_region
      %203 = dma.done [#allocation5], 32
    $region33: #{tpu_custom_call.1} parent=1 // pred_fallthru
      _
    // Predicated region
    $region34: #{tpu_custom_call.1} parent=1 // pred_check
      _
    $region35: #{tpu_custom_call.1} parent=1 // pred_check_branch
      %205 = sbr.rel (0) target = $region37
    $region36: #{tpu_custom_call.1} parent=1 // pred_region
      %206 = dma.done [#allocation10], 32
    $region37: #{tpu_custom_call.1} parent=1 // pred_fallthru
      _
    %207 = vsyncpa [#allocation4], 1
    %208 = vsyncpa [#allocation7], 1
    %209 = vsyncpa [#allocation5], 1
    %210 = vsyncpa [#allocation10], 1

</llo_original>
